<compile_context>
chip_gen: v5e
topology: v5e:2x2
jax: 0.10.0
libtpu: 0.0.40
codegen_flags: <defaults>
</compile_context>

<pallas_src>
import functools

import jax
import jax.numpy as jnp
from jax.experimental import pallas as pl
from jax.experimental.pallas import tpu as pltpu


def _round_up(x, m):
    return (x + m - 1) // m * m


def _cdiv(a, b):
    return (a + b - 1) // b


def _choose_tile_rows(n, requested):
    """Row-tile: multiple of 128, <= n (for n >= 128), and small enough that the
    'parallel' grid keeps >= ~4 steps for large N (v7x dual-TC), but never below
    1024 rows (per-step overhead)."""
    requested = max(128, _round_up(int(requested), 128))
    if n <= 128:
        return 128
    par_cap = max(1024, _round_up(_cdiv(n, 4), 128))
    return max(128, min(requested, par_cap, (n // 128) * 128))


def _edl_loss_kernel(y_ref, logit_ref, out_ref, *, n_rows, tile_rows):
    """One grid step: native (tile_rows, C) logit tile + (1, tile_rows) target
    tile -> this tile's partial loss written as an SMEM scalar.

    The logit tile is relayouted in-kernel to lane-dense (C, tile_rows) (rows on
    the 128-wide lane axis) so exp/log run on full vregs; the XLU relayout rides
    in a slot with slack and stays hidden under the HBM DMA."""
    i = pl.program_id(0)

    logit_t = jnp.transpose(logit_ref[...].astype(jnp.float32))       # (C, TN)
    c = logit_t.shape[0]

    # evidence='exp': exp(clamp(logit, -10, 10)); pred_alpha = evidence + 1
    alpha = jnp.exp(jnp.clip(logit_t, -10.0, 10.0)) + 1.0             # (C, TN)

    s = jnp.sum(alpha, axis=0, keepdims=True)                         # (1, TN)
    sum_log_alpha = jnp.sum(jnp.log(alpha), axis=0, keepdims=True)    # (1, TN)

    y = y_ref[...].astype(jnp.float32)                                # (1, TN)
    # y * sum_c(log S - log alpha_c) == y * (C*log S - sum_c log alpha_c)
    row_loss = y * (jnp.float32(c) * jnp.log(s) - sum_log_alpha)      # (1, TN)

    # Ragged tail: lanes past n_rows hold uninitialized VMEM. Mask with a select
    # (NOT a y*0 multiply) so NaN/Inf garbage cannot poison the tile partial.
    lane = jax.lax.broadcasted_iota(jnp.int32, row_loss.shape, 1)
    valid = (i * tile_rows + lane) < n_rows
    out_ref[0, 0] = jnp.sum(jnp.where(valid, row_loss, 0.0))


def evidence_loss(logit, target, *, tile_n=8192):
    """Pallas implementation of EvidenceLoss.forward (loss_type='log',
    evidence='exp'). Returns the scalar total_loss.

    logit : (N, C) array, C = num_cls + 1   (bf16/f32; cast to f32 in-kernel)
    target: (N, 1) or (N,) array            (kept in its original dtype)
    """
    if logit.ndim > 2:
        # Same reshape glue as the PyTorch module: (N, C, ...) -> (N*spatial, C).
        n0, c0 = logit.shape[0], logit.shape[1]
        logit = logit.reshape(n0, c0, -1).transpose(0, 2, 1).reshape(-1, c0)
        # TODO(synk): this spatial path assumes `target` already provides one
        # value per flattened (N*spatial) logit row, as the PyTorch broadcast
        # y * (...) requires; validate/expand target before using that path.

    n, c = logit.shape
    # Degenerate-dim reshape only (layout-free); keep original dtype, cast in-kernel.
    target_r = jnp.reshape(target, (1, n))

    tile_rows = _choose_tile_rows(n, tile_n)

    n_kernel = n
    if n < tile_rows:
        # Tiny-N only (N < 128): pad rows so no block dim exceeds its array dim.
        # The large-N hot path stays pad-free; padded rows are masked in-kernel.
        pad = tile_rows - n
        logit = jnp.pad(logit, ((0, pad), (0, 0)))
        target_r = jnp.pad(target_r, ((0, 0), (0, pad)))
        n_kernel = tile_rows

    num_tiles = _cdiv(n_kernel, tile_rows)

    kernel = functools.partial(_edl_loss_kernel, n_rows=n, tile_rows=tile_rows)

    cost = pl.CostEstimate(
        flops=6 * n * c,
        transcendentals=n * (2 * c + 1),
        bytes_accessed=int(logit.size * logit.dtype.itemsize
                           + target_r.size * target_r.dtype.itemsize
                           + 4 * num_tiles),
    )

    partials = pl.pallas_call(
        kernel,
        out_shape=jax.ShapeDtypeStruct((num_tiles, 1), jnp.float32),
        grid_spec=pltpu.PrefetchScalarGridSpec(
            num_scalar_prefetch=0,
            grid=(num_tiles,),
            in_specs=[
                pl.BlockSpec((1, tile_rows), lambda i: (0, i)),    # target tile
                pl.BlockSpec((tile_rows, c), lambda i: (i, 0)),    # native logit tile
            ],
            out_specs=pl.BlockSpec(
                (1, 1), lambda i: (i, 0),
                memory_space=pltpu.MemorySpace.SMEM),              # per-tile partial
        ),
        compiler_params=pltpu.CompilerParams(
            dimension_semantics=("parallel",),       # independent tiles (v7x: both TCs)
            vmem_limit_bytes=32 * 1024 * 1024,       # native (tile, C) tiles are lane-padded
        ),
        cost_estimate=cost,
    )(target_r, logit)

    return jnp.sum(partials)


def evidence_loss_ref(logit, target):
    """Pure-JAX reference mirroring the PyTorch forward."""
    evidence = jnp.exp(jnp.clip(logit.astype(jnp.float32), -10.0, 10.0))
    alpha = evidence + 1.0
    s = jnp.sum(alpha, axis=1, keepdims=True)
    t = jnp.reshape(target, (-1, 1)).astype(jnp.float32)
    return jnp.sum(jnp.sum(t * (jnp.log(s) - jnp.log(alpha)), axis=1))


if __name__ == "__main__":
    # num_cls = 8 -> logit has K+1 = 9 classes (open-set "unknown" slot)
    num_cls = 8
    C = num_cls + 1

    key = jax.random.PRNGKey(0)
    k1, k2, k3, k4, k5, k6 = jax.random.split(key, 6)

    # (1) tiny batch (exercises the N < 128 pad-to-one-tile path)
    N1 = 16
    logit1 = jax.random.normal(k1, (N1, C), dtype=jnp.float32) * 3.0
    target1 = jax.random.uniform(k2, (N1, 1), dtype=jnp.float32)
    out1 = jax.block_until_ready(evidence_loss(logit1, target1))
    ref1 = evidence_loss_ref(logit1, target1)
    assert jnp.allclose(out1, ref1, rtol=1e-5, atol=1e-4), (out1, ref1)

    # (2) ragged tiny batch
    N2 = 50
    logit2 = jax.random.normal(k3, (N2, C), dtype=jnp.float32) * 3.0
    target2 = jax.random.uniform(k4, (N2, 1), dtype=jnp.float32)
    out2 = jax.block_until_ready(evidence_loss(logit2, target2))
    ref2 = evidence_loss_ref(logit2, target2)
    assert jnp.allclose(out2, ref2, rtol=1e-5, atol=1e-4), (out2, ref2)

    # (3) multi-tile parallel grid with a partial (masked) final block
    N3 = 300
    logit3 = jax.random.normal(k5, (N3, C), dtype=jnp.float32) * 3.0
    target3 = jax.random.uniform(k6, (N3, 1), dtype=jnp.float32)
    out3 = jax.block_until_ready(evidence_loss(logit3, target3, tile_n=128))
    ref3 = evidence_loss_ref(logit3, target3)
    assert jnp.allclose(out3, ref3, rtol=1e-5, atol=1e-4), (out3, ref3)

    print("KERNEL_OK")
</pallas_src>

<mosaic_0001>
module attributes {stable_mosaic.version = 11 : i64} {
  func.func @_edl_loss_kernel(%arg0: i32, %arg1: memref<1x128xf32, #tpu.memory_space<vmem>>, %arg2: memref<128x9xf32, #tpu.memory_space<vmem>>, %arg3: memref<1x1xf32, #tpu.memory_space<smem>>) attributes {dimension_semantics = [#tpu.dimension_semantics<parallel>], iteration_bounds = array<i64: 1>, scalar_prefetch = 0 : i64, scratch_operands = 0 : i64, tpu.core_type = #tpu.core_type<tc>, window_params = [{transform_indices = @transform_0, window_bounds = array<i64: 1, 128>}, {transform_indices = @transform_1, window_bounds = array<i64: 128, 9>}, {transform_indices = @transform_2, window_bounds = array<i64: 1, 1>}]} {
    %c0 = arith.constant 0 : index
    %c0_0 = arith.constant 0 : index
    %0 = vector.load %arg2[%c0, %c0_0] : memref<128x9xf32, #tpu.memory_space<vmem>>, vector<128x9xf32>
    %1 = tpu.transpose %0, [1, 0] : vector<128x9xf32> -> vector<9x128xf32>
    %cst = arith.constant -1.000000e+01 : f32
    %cst_1 = arith.constant 1.000000e+01 : f32
    %2 = vector.broadcast %cst : f32 to vector<9x128xf32>
    %3 = arith.maximumf %2, %1 : vector<9x128xf32>
    %4 = vector.broadcast %cst_1 : f32 to vector<9x128xf32>
    %5 = arith.minimumf %4, %3 : vector<9x128xf32>
    %6 = math.exp %5 : vector<9x128xf32>
    %cst_2 = arith.constant 1.000000e+00 : f32
    %7 = vector.broadcast %cst_2 : f32 to vector<9x128xf32>
    %8 = arith.addf %6, %7 : vector<9x128xf32>
    %cst_3 = arith.constant dense<0.000000e+00> : vector<128xf32>
    %9 = vector.multi_reduction <add>, %8, %cst_3 [0] : vector<9x128xf32> to vector<128xf32>
    %10 = vector.shape_cast %9 : vector<128xf32> to vector<1x128xf32>
    %11 = math.log %8 : vector<9x128xf32>
    %cst_4 = arith.constant dense<0.000000e+00> : vector<128xf32>
    %12 = vector.multi_reduction <add>, %11, %cst_4 [0] : vector<9x128xf32> to vector<128xf32>
    %13 = vector.shape_cast %12 : vector<128xf32> to vector<1x128xf32>
    %c0_5 = arith.constant 0 : index
    %c0_6 = arith.constant 0 : index
    %14 = vector.load %arg1[%c0_5, %c0_6] : memref<1x128xf32, #tpu.memory_space<vmem>>, vector<1x128xf32>
    %15 = math.log %10 : vector<1x128xf32>
    %cst_7 = arith.constant 9.000000e+00 : f32
    %16 = vector.broadcast %cst_7 : f32 to vector<1x128xf32>
    %17 = arith.mulf %16, %15 : vector<1x128xf32>
    %18 = arith.subf %17, %13 : vector<1x128xf32>
    %19 = arith.mulf %14, %18 : vector<1x128xf32>
    %20 = tpu.iota {dimensions = array<i32: 1>} : vector<1x128xi32>
    %c128_i32 = arith.constant 128 : i32
    %21 = arith.muli %arg0, %c128_i32 : i32
    %22 = vector.broadcast %21 : i32 to vector<1x128xi32>
    %23 = arith.addi %22, %20 : vector<1x128xi32>
    %c16_i32 = arith.constant 16 : i32
    %24 = vector.broadcast %c16_i32 : i32 to vector<1x128xi32>
    %25 = arith.cmpi slt, %23, %24 : vector<1x128xi32>
    %cst_8 = arith.constant 0.000000e+00 : f32
    %26 = vector.broadcast %cst_8 : f32 to vector<1x128xf32>
    %27 = arith.select %25, %19, %26 : vector<1x128xi1>, vector<1x128xf32>
    %28 = vector.shape_cast %27 : vector<1x128xf32> to vector<1x1x128xf32>
    %cst_9 = arith.constant dense<0.000000e+00> : vector<1xf32>
    %29 = vector.multi_reduction <add>, %28, %cst_9 [1, 2] : vector<1x1x128xf32> to vector<1xf32>
    %30 = vector.shape_cast %29 : vector<1xf32> to vector<1x1x1xf32>
    %31 = vector.extract %30[0, 0, 0] : f32 from vector<1x1x1xf32>
    %c0_10 = arith.constant 0 : index
    %c0_11 = arith.constant 0 : index
    %32 = memref.load %arg3[%c0_10, %c0_11] : memref<1x1xf32, #tpu.memory_space<smem>>
    memref.store %31, %arg3[%c0_10, %c0_11] : memref<1x1xf32, #tpu.memory_space<smem>>
    return
  }
  func.func @transform_0(%arg0: i32) -> (i32, i32) {
    %c0_i32 = arith.constant 0 : i32
    %c0_i32_0 = arith.constant 0 : i32
    return %c0_i32, %arg0 : i32, i32
  }
  func.func @transform_1(%arg0: i32) -> (i32, i32) {
    %c0_i32 = arith.constant 0 : i32
    %c0_i32_0 = arith.constant 0 : i32
    return %arg0, %c0_i32 : i32, i32
  }
  func.func @transform_2(%arg0: i32) -> (i32, i32) {
    %c0_i32 = arith.constant 0 : i32
    %c0_i32_0 = arith.constant 0 : i32
    return %arg0, %c0_i32 : i32, i32
  }
}

</mosaic_0001>

<llo_original>
// kernel: tpu_custom_call.1
$region0: #{tpu_custom_call.1}
  #allocation0 [shape = 'u32[]', space=smem, size = 0x4, offset = 0x4, fixed_abs, tag = 'smem constant byte address 0x4 - core index']
  #allocation1 [shape = 'u32[72,128]{1,0:T(1,128)}', space=vmem, size = 0x9000, scoped, tag = 'internal scratch']
  %s0 = inlined_call_operand.vmem [shape: f32[1,128], index: 0, kind: input, shape index: {}]
  %s1 = inlined_call_operand.vmem [shape: f32[128,9], index: 1, kind: input, shape index: {}]
  %s2 = inlined_call_operand.hbm [shape: f32[1,1], index: 2, kind: output, shape index: {}]
  %s3 = sld [smem:[#allocation0]]
  $region18: #{tpu_custom_call.1} parent=0
    _
  %s5 = ssub.s32 1, %s3
  %s6 = scalar_select 0, %s5, %s3
  $region1: #{tpu_custom_call.1} parent=0
    #allocation2 [shape = 'u8[512]{0}', space=smem, size = 0x200, scoped, tag = 'output window, operand 0, single buffered']
    #allocation3 [shape = 's32[1]{0}', space=sflag, size = 0x4, scoped, tag = 'scoped memory for tpu_custom_call.1']
    %7 = vsyncpa [#allocation3], 0
    // Predicated region
    $region2: #{tpu_custom_call.1} parent=1 // pred_check
      _
    $region3: #{tpu_custom_call.1} parent=1 // pred_check_branch
      %9 = sbr.rel (0) target = $region5
    $region4: #{tpu_custom_call.1} parent=1 // pred_region
      _
    $region5: #{tpu_custom_call.1} parent=1 // pred_fallthru
      _
    // Predicated region
    $region6: #{tpu_custom_call.1} parent=1 // pred_check
      _
    $region7: #{tpu_custom_call.1} parent=1 // pred_check_branch
      %11 = sbr.rel (0) target = $region9
    $region8: #{tpu_custom_call.1} parent=1 // pred_region
      _
    $region9: #{tpu_custom_call.1} parent=1 // pred_fallthru
      _
    %v12 = vld [vmem:[%s1] sm:$0xff]
    %v13 = vld [vmem:[%s1 + $0x8] sm:$0xff]
    %v14 = vld [vmem:[%s1 + $0x10] sm:$0xff]
    %v15 = vld [vmem:[%s1 + $0x18] sm:$0xff]
    %v16 = vld [vmem:[%s1 + $0x20] sm:$0xff]
    %v17 = vld [vmem:[%s1 + $0x28] sm:$0xff]
    %v18 = vld [vmem:[%s1 + $0x30] sm:$0xff]
    %v19 = vld [vmem:[%s1 + $0x38] sm:$0xff]
    %v20 = vld [vmem:[%s1 + $0x40] sm:$0xff]
    %v21 = vld [vmem:[%s1 + $0x48] sm:$0xff]
    %v22 = vld [vmem:[%s1 + $0x50] sm:$0xff]
    %v23 = vld [vmem:[%s1 + $0x58] sm:$0xff]
    %v24 = vld [vmem:[%s1 + $0x60] sm:$0xff]
    %v25 = vld [vmem:[%s1 + $0x68] sm:$0xff]
    %v26 = vld [vmem:[%s1 + $0x70] sm:$0xff]
    %v27 = vld [vmem:[%s1 + $0x78] sm:$0xff]
    %28 = vxpose.xlu0.b32.start [1/16] %v12, 128
    %29 = vxpose.xlu0.b32.cont [2/16] %v13, 128
    %30 = vxpose.xlu0.b32.cont [3/16] %v14, 128
    %31 = vxpose.xlu0.b32.cont [4/16] %v15, 128
    %32 = vxpose.xlu0.b32.cont [5/16] %v16, 128
    %33 = vxpose.xlu0.b32.cont [6/16] %v17, 128
    %34 = vxpose.xlu0.b32.cont [7/16] %v18, 128
    %35 = vxpose.xlu0.b32.cont [8/16] %v19, 128
    %36 = vxpose.xlu0.b32.cont [9/16] %v20, 128
    %37 = vxpose.xlu0.b32.cont [10/16] %v21, 128
    %38 = vxpose.xlu0.b32.cont [11/16] %v22, 128
    %39 = vxpose.xlu0.b32.cont [12/16] %v23, 128
    %40 = vxpose.xlu0.b32.cont [13/16] %v24, 128
    %41 = vxpose.xlu0.b32.cont [14/16] %v25, 128
    %42 = vxpose.xlu0.b32.cont [15/16] %v26, 128
    %43 = vxpose.xlu0.b32.end [16/16] %v27, 128
    %v44 = vpop.trf.xlu0
    %v45 = vpop.trf.xlu0
    %v46 = vpop.trf.xlu0
    %v47 = vpop.trf.xlu0
    %v48 = vpop.trf.xlu0
    %v49 = vpop.trf.xlu0
    %v50 = vpop.trf.xlu0
    %v51 = vpop.trf.xlu0
    %v52 = vpop.trf.xlu0
    %v53 = vpop.trf.xlu0
    %v54 = vpop.trf.xlu0
    %v55 = vpop.trf.xlu0
    %v56 = vpop.trf.xlu0
    %v57 = vpop.trf.xlu0
    %v58 = vpop.trf.xlu0
    %v59 = vpop.trf.xlu0
    %v60 = vmax.f32 %v44, -10.0
    %v61 = vmax.f32 %v45, -10.0
    %v62 = vmin.f32 %v60, 10.0
    %v63 = vmin.f32 %v61, 10.0
    %v64 = vmul.f32 %v62, 1.442695
    %v65 = vpow.pop %v64
    %v66 = vmul.f32 %v63, 1.442695
    %v67 = vpow.pop %v66
    %v68 = vadd.f32 %v65, 1.0
    %v69 = vadd.f32 %v67, 1.0
    %vm70 = vcmask 1040384
    %v71 = vsel %vm70, %v69, 0.0
    %v72 = vadd.f32 %v68, %v71
    %v73 = vrot.slane %v72, 4
    %v74 = vadd.f32 %v72, %v73
    %v75 = vrot.slane %v74, 2
    %v76 = vadd.f32 %v74, %v75
    %v77 = vrot.slane %v76, 1
    %v78 = vadd.f32 %v76, %v77
    %v79 = vlog2.pop %v68
    %v80 = vmul.f32 %v79, 0.6931472
    %v81 = vlog2.pop %v69
    %v82 = vmul.f32 %v81, 0.6931472
    %v83 = vsel %vm70, %v82, 0.0
    %v84 = vadd.f32 %v80, %v83
    %v85 = vrot.slane %v84, 4
    %v86 = vadd.f32 %v84, %v85
    %v87 = vrot.slane %v86, 2
    %v88 = vadd.f32 %v86, %v87
    %v89 = vrot.slane %v88, 1
    %v90 = vadd.f32 %v88, %v89
    %v91 = vld [vmem:[%s0] sm:$0x1]
    %v92 = vlog2.pop %v78
    %v93 = vmul.f32 %v92, 0.6931472
    %v94 = vmul.f32 %v93, 9.0
    %v95 = vsub.f32 %v94, %v90
    %v96 = vmul.f32 %v91, %v95
    %v97 = vlaneseq
    %v98 = vand.u32 %v97, 127
    %s99 = smul.u32 0, 128
    %v100 = vstv %s99
    %v101 = vadd.s32 %v100, %v98
    %vm102 = vcmp.lt.s32.totalorder %v101, 16
    %v103 = vsel %vm102, %v96, 0.0
    %v104 = vsel %vm70, %v103, 0.0
    %105 = vadd.xlane.f32.xlu0 %v104
    %v106 = vpop.xlane.xlu0 %105
    %v107 = vrot.slane %v106, 4
    %v108 = vadd.f32 %v106, %v107
    %v109 = vrot.slane %v108, 2
    %v110 = vadd.f32 %v108, %v109
    %v111 = vrot.slane %v110, 1
    %v112 = vadd.f32 %v110, %v111
    %s113 = vtos %v112
    %s114 = scalar_lea.smem [#allocation2], 0
    %115 = sst [smem:[%s114]] %s113
    // Predicated region
    $region10: #{tpu_custom_call.1} parent=1 // pred_check
      _
    $region11: #{tpu_custom_call.1} parent=1 // pred_check_branch
      %117 = sbr.rel (0) target = $region13
    $region12: #{tpu_custom_call.1} parent=1 // pred_region
      %119 = vsyncadd [#allocation3], 0
      %s121 = sshll.u32 %s2, 4
      %s122 = int_to_ptr.hbm [resolvable:$true] %s121
      %124 = dma.smem_to_hbm [#allocation2], 16, %s122, [#allocation3]
    $region13: #{tpu_custom_call.1} parent=1 // pred_fallthru
      _
    // Predicated region
    $region14: #{tpu_custom_call.1} parent=1 // pred_check
      _
    $region15: #{tpu_custom_call.1} parent=1 // pred_check_branch
      %126 = sbr.rel (0) target = $region17
    $region16: #{tpu_custom_call.1} parent=1 // pred_region
      %128 = dma.done [#allocation3], 16
    $region17: #{tpu_custom_call.1} parent=1 // pred_fallthru
      _
    %129 = sfence
    %130 = vsyncpa [#allocation3], 1

</llo_original>
